<compile_context>
chip_gen: v5e
topology: v5e:2x2
jax: 0.10.0
libtpu: 0.0.40
codegen_flags: <defaults>
</compile_context>

<pallas_src>
import functools

import jax
import jax.numpy as jnp
from jax.experimental import pallas as pl
from jax.experimental.pallas import tpu as pltpu


def _round_up(x: int, m: int) -> int:
    return ((x + m - 1) // m) * m


# --------------------------------------------------------------------------
# Kernel 1: all stage weights resident in VMEM, one invocation per batch tile.
# --------------------------------------------------------------------------
def _pipemt_resident_kernel(x_ref, w_ref, b_ref, o_ref, *, n_stages):
    """x_ref: (TB, H) in-dtype | w_ref: (L, H, H) bf16 | b_ref: (L, 1, H) f32
    o_ref: (TB, H) out-dtype."""
    h = x_ref[...].astype(jnp.float32)           # activation stays on-chip (f32)
    for l in range(n_stages):                    # static unroll: L small & known
        w = w_ref[l]                             # (H, H) bf16, static slice
        b = b_ref[l]                             # (1, H) f32, broadcasts over rows
        y = jnp.dot(h.astype(jnp.bfloat16), w,   # bf16 MXU operands, f32 accumulate
                    preferred_element_type=jnp.float32) + b
        if l != n_stages - 1:                    # ReLU between stages only (static)
            y = jnp.maximum(y, 0.0)
        h = y
    o_ref[...] = h.astype(o_ref.dtype)


# --------------------------------------------------------------------------
# Kernel 2: stream one (H, H) weight per stage (trailing "arbitrary" axis),
# activation carried in VMEM scratch.  For stacks too big to keep resident.
# --------------------------------------------------------------------------
def _pipemt_stream_kernel(x_ref, w_ref, b_ref, o_ref, h_scratch):
    """x_ref: (TB, H) | w_ref: (1, H, H) bf16 | b_ref: (1, 1, H) f32
    o_ref: (TB, H) | h_scratch: (TB, H) f32 (persists across stage steps)."""
    l = pl.program_id(1)
    n = pl.num_programs(1)

    @pl.when(l == 0)
    def _():
        h_scratch[...] = x_ref[...].astype(jnp.float32)

    h = h_scratch[...]
    y = jnp.dot(h.astype(jnp.bfloat16), w_ref[0],
                preferred_element_type=jnp.float32) + b_ref[0]
    # ReLU between stages only (skip after the last stage).
    y = jnp.where(l == n - 1, y, jnp.maximum(y, 0.0))
    h_scratch[...] = y

    @pl.when(l == n - 1)
    def _():
        o_ref[...] = y.astype(o_ref.dtype)


# --------------------------------------------------------------------------
# Wrapper
# --------------------------------------------------------------------------
def pipemt_forward(x, weights, biases, *, batch_tile=512, out_dtype=None,
                   weight_stream_threshold_bytes=24 * 1024 * 1024):
    """Sequential application of L pipeline stages: Linear(H, H) (+ReLU except last).

    x:       (B, H)   f32 or bf16 (kept as-is: no wrapper-side cast pass)
    weights: (L, H, H)
    biases:  (L, H) or (L, 1, H)
    """
    L, H, H2 = weights.shape
    assert H == H2, "stages must be Linear(H, H)"
    B = x.shape[0]
    out_dtype = x.dtype if out_dtype is None else jnp.dtype(out_dtype)

    w_bf16 = weights.astype(jnp.bfloat16)              # halve weight HBM/VMEM
    b_f32 = biases.reshape(L, 1, H).astype(jnp.float32)

    # ---- batch tiling: cdiv + pad (no whole-batch fallback), >= 2 grid steps
    # so the activation DMA pipelines and v7x megacore can split the batch.
    tb = min(int(batch_tile), _round_up(pl.cdiv(B, 2), 8))
    tb = max(tb, 8)
    b_pad = _round_up(B, tb)
    x_in = x if b_pad == B else jnp.pad(x, ((0, b_pad - B), (0, 0)))
    n_bt = b_pad // tb

    in_itemsize = jnp.dtype(x.dtype).itemsize
    out_itemsize = out_dtype.itemsize
    io_vmem = 2 * tb * H * in_itemsize + 2 * tb * H * out_itemsize  # dbl-buffered I/O

    w_stack_bytes = L * H * H * 2
    stream = w_stack_bytes > weight_stream_threshold_bytes

    flops = 2 * b_pad * H * H * L

    if not stream:
        # ---------------- resident path ----------------
        vmem_need = w_stack_bytes + L * H * 4 + io_vmem          # weights single-buffered
        bytes_accessed = (x_in.size * in_itemsize + w_stack_bytes
                          + b_f32.size * 4 + b_pad * H * out_itemsize)
        kernel = functools.partial(_pipemt_resident_kernel, n_stages=L)
        grid_spec = pltpu.PrefetchScalarGridSpec(
            num_scalar_prefetch=0,
            grid=(n_bt,),
            in_specs=[
                pl.BlockSpec((tb, H), lambda i: (i, 0)),                 # activation tile
                pl.BlockSpec((L, H, H), lambda i: (0, 0, 0),             # full weight stack,
                             pipeline_mode=pl.Buffered(1)),              #   fetched once
                pl.BlockSpec((L, 1, H), lambda i: (0, 0, 0),             # full bias stack
                             pipeline_mode=pl.Buffered(1)),
            ],
            out_specs=pl.BlockSpec((tb, H), lambda i: (i, 0)),
        )
        dim_sem = ("parallel",)
    else:
        # ---------------- streaming path ----------------
        # Weight VMEM is 2*H*H*2 bytes regardless of L; stage l+1's weight DMA
        # hides behind stage l's matmul.
        vmem_need = 2 * H * H * 2 + 2 * H * 4 + io_vmem + tb * H * 4    # + f32 scratch
        bytes_accessed = (x_in.size * in_itemsize + n_bt * w_stack_bytes
                          + n_bt * b_f32.size * 4 + b_pad * H * out_itemsize)
        kernel = _pipemt_stream_kernel
        grid_spec = pltpu.PrefetchScalarGridSpec(
            num_scalar_prefetch=0,
            grid=(n_bt, L),
            in_specs=[
                pl.BlockSpec((tb, H), lambda i, l: (i, 0)),
                pl.BlockSpec((1, H, H), lambda i, l: (l, 0, 0)),
                pl.BlockSpec((1, 1, H), lambda i, l: (l, 0, 0)),
            ],
            out_specs=pl.BlockSpec((tb, H), lambda i, l: (i, 0)),
            scratch_shapes=[pltpu.VMEM((tb, H), jnp.float32)],
        )
        dim_sem = ("parallel", "arbitrary")

    # Explicit VMEM budget: stay above the computed need (with margin) but well
    # below physical capacity (128 MiB v5e/v6e, 64 MiB per-TC on v7x).
    try:
        phys_vmem = pltpu.get_tpu_info().vmem_capacity_bytes
    except Exception:  # pragma: no cover - conservative fallback
        phys_vmem = 128 * 1024 * 1024
    vmem_limit = int(min(int(phys_vmem * 0.75),
                         max(32 * 1024 * 1024, int(vmem_need * 2) + (2 << 20))))

    out_padded = pl.pallas_call(
        kernel,
        out_shape=jax.ShapeDtypeStruct((b_pad, H), out_dtype),
        grid_spec=grid_spec,
        compiler_params=pltpu.CompilerParams(
            dimension_semantics=dim_sem,
            vmem_limit_bytes=vmem_limit,
        ),
        cost_estimate=pl.CostEstimate(
            flops=flops, transcendentals=0, bytes_accessed=bytes_accessed),
    )(x_in, w_bf16, b_f32)

    return out_padded if b_pad == B else out_padded[:B]


# --------------------------------------------------------------------------
# Pure-JAX reference (matches the kernel's bf16-operand / f32-accumulate math).
# NOTE: activations are re-quantized to bf16 before every stage matmul; this
# deviates slightly from an all-f32 torch Linear pipeline.
# --------------------------------------------------------------------------
def pipemt_reference(x, weights, biases):
    L, _, H = weights.shape
    w = weights.astype(jnp.bfloat16).astype(jnp.float32)   # same rounding as kernel
    b = biases.reshape(L, 1, H).astype(jnp.float32)
    h = x.astype(jnp.float32)
    for l in range(L):
        hb = h.astype(jnp.bfloat16).astype(jnp.float32)
        h = jnp.dot(hb, w[l], precision=jax.lax.Precision.HIGHEST) + b[l]
        if l != L - 1:
            h = jnp.maximum(h, 0.0)
    return h


if __name__ == "__main__":
    # Synthetic wrapped model: nn.Sequential of L Linear(H, H) stages.
    # B=100 is deliberately NOT a tile multiple (exercises cdiv + padding) and
    # yields a 2-step batch grid (software pipelining / megacore split).
    B, H, L = 100, 128, 3

    key = jax.random.PRNGKey(0)
    kx, kw, kb = jax.random.split(key, 3)
    x = jax.random.normal(kx, (B, H), dtype=jnp.float32)
    weights = jax.random.normal(kw, (L, H, H), dtype=jnp.float32) * (1.0 / jnp.sqrt(H))
    biases = jax.random.normal(kb, (L, H), dtype=jnp.float32) * 0.01

    ref = pipemt_reference(x, weights, biases)

    # Resident-weight path (default).
    out_res = jax.block_until_ready(pipemt_forward(x, weights, biases))
    assert out_res.shape == (B, H)
    assert jnp.allclose(out_res, ref, atol=2e-2, rtol=2e-2), "resident path mismatch"

    # Streaming-weight path (forced, so the large-H/v7x code path is verified).
    out_str = jax.block_until_ready(
        pipemt_forward(x, weights, biases, weight_stream_threshold_bytes=0))
    assert out_str.shape == (B, H)
    assert jnp.allclose(out_str, ref, atol=2e-2, rtol=2e-2), "streaming path mismatch"

    print("KERNEL_OK")
</pallas_src>

<mosaic_0001>
module attributes {stable_mosaic.version = 11 : i64} {
  func.func @_pipemt_resident_kernel(%arg0: i32, %arg1: memref<56x128xf32, #tpu.memory_space<vmem>>, %arg2: memref<3x128x128xbf16, #tpu.memory_space<vmem>>, %arg3: memref<3x1x128xf32, #tpu.memory_space<vmem>>, %arg4: memref<56x128xf32, #tpu.memory_space<vmem>>) attributes {dimension_semantics = [#tpu.dimension_semantics<parallel>], iteration_bounds = array<i64: 2>, scalar_prefetch = 0 : i64, scratch_operands = 0 : i64, tpu.core_type = #tpu.core_type<tc>, window_params = [{transform_indices = @transform_0, window_bounds = array<i64: 56, 128>}, {pipeline_mode = #tpu.pipeline_mode<synchronous>, transform_indices = @transform_1, window_bounds = array<i64: 3, 128, 128>}, {pipeline_mode = #tpu.pipeline_mode<synchronous>, transform_indices = @transform_2, window_bounds = array<i64: 3, 1, 128>}, {transform_indices = @transform_3, window_bounds = array<i64: 56, 128>}]} {
    %c0 = arith.constant 0 : index
    %c0_0 = arith.constant 0 : index
    %0 = vector.load %arg1[%c0, %c0_0] : memref<56x128xf32, #tpu.memory_space<vmem>>, vector<56x128xf32>
    %c0_1 = arith.constant 0 : index
    %c0_2 = arith.constant 0 : index
    %c0_3 = arith.constant 0 : index
    %1 = vector.load %arg2[%c0_1, %c0_2, %c0_3] : memref<3x128x128xbf16, #tpu.memory_space<vmem>>, vector<1x128x128xbf16>
    %2 = vector.shape_cast %1 : vector<1x128x128xbf16> to vector<128x128xbf16>
    %c0_4 = arith.constant 0 : index
    %c0_5 = arith.constant 0 : index
    %c0_6 = arith.constant 0 : index
    %3 = vector.load %arg3[%c0_4, %c0_5, %c0_6] : memref<3x1x128xf32, #tpu.memory_space<vmem>>, vector<1x1x128xf32>
    %4 = vector.shape_cast %3 : vector<1x1x128xf32> to vector<1x128xf32>
    %5 = arith.truncf %0 : vector<56x128xf32> to vector<56x128xbf16>
    %cst = arith.constant dense<0.000000e+00> : vector<56x128xf32>
    %6 = tpu.matmul %5, %2, %cst {dimension_numbers = #tpu.dot_dimension_numbers<[1], [0], [0], [1], [0, 0, 1, 1], [], []>} : vector<56x128xbf16>, vector<128x128xbf16>, vector<56x128xf32> -> vector<56x128xf32>
    %7 = vector.broadcast %4 : vector<1x128xf32> to vector<56x128xf32>
    %8 = arith.addf %6, %7 : vector<56x128xf32>
    %cst_7 = arith.constant 0.000000e+00 : f32
    %9 = vector.broadcast %cst_7 : f32 to vector<56x128xf32>
    %10 = arith.maximumf %8, %9 : vector<56x128xf32>
    %c1 = arith.constant 1 : index
    %c0_8 = arith.constant 0 : index
    %c0_9 = arith.constant 0 : index
    %11 = vector.load %arg2[%c1, %c0_8, %c0_9] : memref<3x128x128xbf16, #tpu.memory_space<vmem>>, vector<1x128x128xbf16>
    %12 = vector.shape_cast %11 : vector<1x128x128xbf16> to vector<128x128xbf16>
    %c1_10 = arith.constant 1 : index
    %c0_11 = arith.constant 0 : index
    %c0_12 = arith.constant 0 : index
    %13 = vector.load %arg3[%c1_10, %c0_11, %c0_12] : memref<3x1x128xf32, #tpu.memory_space<vmem>>, vector<1x1x128xf32>
    %14 = vector.shape_cast %13 : vector<1x1x128xf32> to vector<1x128xf32>
    %15 = arith.truncf %10 : vector<56x128xf32> to vector<56x128xbf16>
    %cst_13 = arith.constant dense<0.000000e+00> : vector<56x128xf32>
    %16 = tpu.matmul %15, %12, %cst_13 {dimension_numbers = #tpu.dot_dimension_numbers<[1], [0], [0], [1], [0, 0, 1, 1], [], []>} : vector<56x128xbf16>, vector<128x128xbf16>, vector<56x128xf32> -> vector<56x128xf32>
    %17 = vector.broadcast %14 : vector<1x128xf32> to vector<56x128xf32>
    %18 = arith.addf %16, %17 : vector<56x128xf32>
    %cst_14 = arith.constant 0.000000e+00 : f32
    %19 = vector.broadcast %cst_14 : f32 to vector<56x128xf32>
    %20 = arith.maximumf %18, %19 : vector<56x128xf32>
    %c2 = arith.constant 2 : index
    %c0_15 = arith.constant 0 : index
    %c0_16 = arith.constant 0 : index
    %21 = vector.load %arg2[%c2, %c0_15, %c0_16] : memref<3x128x128xbf16, #tpu.memory_space<vmem>>, vector<1x128x128xbf16>
    %22 = vector.shape_cast %21 : vector<1x128x128xbf16> to vector<128x128xbf16>
    %c2_17 = arith.constant 2 : index
    %c0_18 = arith.constant 0 : index
    %c0_19 = arith.constant 0 : index
    %23 = vector.load %arg3[%c2_17, %c0_18, %c0_19] : memref<3x1x128xf32, #tpu.memory_space<vmem>>, vector<1x1x128xf32>
    %24 = vector.shape_cast %23 : vector<1x1x128xf32> to vector<1x128xf32>
    %25 = arith.truncf %20 : vector<56x128xf32> to vector<56x128xbf16>
    %cst_20 = arith.constant dense<0.000000e+00> : vector<56x128xf32>
    %26 = tpu.matmul %25, %22, %cst_20 {dimension_numbers = #tpu.dot_dimension_numbers<[1], [0], [0], [1], [0, 0, 1, 1], [], []>} : vector<56x128xbf16>, vector<128x128xbf16>, vector<56x128xf32> -> vector<56x128xf32>
    %27 = vector.broadcast %24 : vector<1x128xf32> to vector<56x128xf32>
    %28 = arith.addf %26, %27 : vector<56x128xf32>
    %c0_21 = arith.constant 0 : index
    %c0_22 = arith.constant 0 : index
    %29 = vector.load %arg4[%c0_21, %c0_22] : memref<56x128xf32, #tpu.memory_space<vmem>>, vector<56x128xf32>
    tpu.vector_store %arg4[%c0_21, %c0_22], %28 {strides = array<i32>} : memref<56x128xf32, #tpu.memory_space<vmem>>, vector<56x128xf32>,
    return
  }
  func.func @transform_0(%arg0: i32) -> (i32, i32) {
    %c0_i32 = arith.constant 0 : i32
    %c0_i32_0 = arith.constant 0 : i32
    return %arg0, %c0_i32 : i32, i32
  }
  func.func @transform_1(%arg0: i32) -> (i32, i32, i32) {
    %c0_i32 = arith.constant 0 : i32
    %c0_i32_0 = arith.constant 0 : i32
    %c0_i32_1 = arith.constant 0 : i32
    %c0_i32_2 = arith.constant 0 : i32
    return %c0_i32, %c0_i32_0, %c0_i32_1 : i32, i32, i32
  }
  func.func @transform_2(%arg0: i32) -> (i32, i32, i32) {
    %c0_i32 = arith.constant 0 : i32
    %c0_i32_0 = arith.constant 0 : i32
    %c0_i32_1 = arith.constant 0 : i32
    %c0_i32_2 = arith.constant 0 : i32
    return %c0_i32, %c0_i32_0, %c0_i32_1 : i32, i32, i32
  }
  func.func @transform_3(%arg0: i32) -> (i32, i32) {
    %c0_i32 = arith.constant 0 : i32
    %c0_i32_0 = arith.constant 0 : i32
    return %arg0, %c0_i32 : i32, i32
  }
}

</mosaic_0001>

<llo_original>
// kernel: tpu_custom_call.1
$region0: #{tpu_custom_call.1}
  #allocation0 [shape = 'u32[]', space=smem, size = 0x4, offset = 0x4, fixed_abs, tag = 'smem constant byte address 0x4 - core index']
  #allocation1 [shape = 'u32[72,128]{1,0:T(1,128)}', space=vmem, size = 0x9000, scoped, tag = 'internal scratch']
  %s0 = inlined_call_operand.hbm [shape: f32[112,128], index: 0, kind: input, shape index: {}]
  %s1 = inlined_call_operand.hbm [shape: bf16[3,128,128], index: 1, kind: input, shape index: {}]
  %s2 = inlined_call_operand.hbm [shape: f32[3,1,128], index: 2, kind: input, shape index: {}]
  %s3 = inlined_call_operand.hbm [shape: f32[112,128], index: 3, kind: output, shape index: {}]
  %s4 = sld [smem:[#allocation0]]
  $region57: #{tpu_custom_call.1} parent=0
    _
  %s6 = ssub.s32 1, %s4
  %s7 = scalar_select 0, %s6, %s4
  $region1: #{tpu_custom_call.1} parent=0
    #allocation2 [shape = 'u8[57344]{0}', space=vmem, size = 0xe000, scoped, tag = 'input window, operand 0']
    #allocation3 [shape = 's32[2]{0}', space=sflag, size = 0x8, scoped, tag = 'scoped memory for tpu_custom_call.1']
    #allocation4 [shape = 's32[2]{0}', space=sflag, size = 0x8, scoped, tag = 'scoped memory for tpu_custom_call.1']
    #allocation5 [shape = 'u8[98304]{0}', space=vmem, size = 0x18000, scoped, tag = 'input window, operand 1, single buffered']
    #allocation6 [shape = 's32[1]{0}', space=sflag, size = 0x4, scoped, tag = 'scoped memory for tpu_custom_call.1']
    #allocation7 [shape = 'u8[1536]{0}', space=vmem, size = 0x800, scoped, tag = 'input window, operand 2, single buffered']
    #allocation8 [shape = 'u8[57344]{0}', space=vmem, size = 0xe000, scoped, tag = 'output window, operand 0']
    %8 = vsyncpa [#allocation3], 0
    %s9 = scalar_lea.sflag [#allocation3], 1
    %10 = vsyncpa %s9, 0
    %11 = vsyncpa [#allocation6], 0
    %12 = vsyncpa [#allocation4], 0
    %s13 = scalar_lea.sflag [#allocation4], 1
    %14 = vsyncpa %s13, 0
    loop: start=0, step=1, limit=4
    $region2: #{tpu_custom_call.1} parent=1 // loop_pre_header
      _
    $region3: #{tpu_custom_call.1} parent=1 // loop_header
      %s16 = sphi 0, %s20
      %p17 = scmp.ge.s32.totalorder %s16, 4
      %s26 = sphi 0, %s28
      %s29 = sphi 0, %s26
      %s30 = sphi 0, %s29
      %s46 = sphi 0, %s30
      %s50 = sphi 0, %s50
      %s52 = sphi 0, %s50
      %s53 = sphi 0, %s52
      %s67 = sphi 0, %s53
      %s71 = sphi 0, %s71
      %s73 = sphi 0, %s71
      %s74 = sphi 0, %s73
      %s88 = sphi 0, %s74
      %s94 = sphi 0, %s96
      %s97 = sphi 0, %s94
      %s98 = sphi 0, %s97
      %s114 = sphi 0, %s98
    $region4: #{tpu_custom_call.1} parent=1 // loop_header_branch
      %19 = sbr.rel (%p17) target = $region8
    $region5: #{tpu_custom_call.1} parent=1 // loop_body
      %s21 = ssub.s32 %s16, 1
      %s22 = ssub.s32 %s16, 2
      %s23 = sadd.s32 %s16, 1
      %s24 = ssub.s32 %s16, %s23
      %p25 = scmp.eq.s32.totalorder %s24, 0
      %s27 = sadd.s32 %s26, 1
      %s28 = scalar_select %p25, %s26, %s27
      %p31 = pneg %p25
      %p32 = scmp.eq.s32.totalorder %s16, 1
      %p33 = por %p31, %p32
      %p34 = scmp.ne.s32.totalorder %s26, %s29
      %p35 = scmp.eq.s32.totalorder %s16, 0
      %p36 = por %p34, %p35
      %p37 = scmp.ne.s32.totalorder %s26, %s29
      %p38 = scmp.eq.s32.totalorder %s21, 1
      %p39 = por %p37, %p38
      %p40 = scmp.ne.s32.totalorder %s29, %s30
      %p41 = scmp.eq.s32.totalorder %s21, 0
      %p42 = por %p40, %p41
      %p43 = scmp.ne.s32.totalorder %s29, %s30
      %p44 = scmp.eq.s32.totalorder %s22, 1
      %p45 = por %p43, %p44
      %p47 = scmp.ne.s32.totalorder %s30, %s46
      %p48 = scmp.eq.s32.totalorder %s22, 0
      %p49 = por %p47, %p48
      %s51 = sadd.s32 %s50, 1
      %p54 = scmp.eq.s32.totalorder %s16, 1
      %p55 = scmp.ne.s32.totalorder %s50, %s52
      %p56 = scmp.eq.s32.totalorder %s16, 0
      %p57 = por %p55, %p56
      %p58 = scmp.ne.s32.totalorder %s50, %s52
      %p59 = scmp.eq.s32.totalorder %s21, 1
      %p60 = por %p58, %p59
      %p61 = scmp.ne.s32.totalorder %s52, %s53
      %p62 = scmp.eq.s32.totalorder %s21, 0
      %p63 = por %p61, %p62
      %p64 = scmp.ne.s32.totalorder %s52, %s53
      %p65 = scmp.eq.s32.totalorder %s22, 1
      %p66 = por %p64, %p65
      %p68 = scmp.ne.s32.totalorder %s53, %s67
      %p69 = scmp.eq.s32.totalorder %s22, 0
      %p70 = por %p68, %p69
      %s72 = sadd.s32 %s71, 1
      %p75 = scmp.eq.s32.totalorder %s16, 1
      %p76 = scmp.ne.s32.totalorder %s71, %s73
      %p77 = scmp.eq.s32.totalorder %s16, 0
      %p78 = por %p76, %p77
      %p79 = scmp.ne.s32.totalorder %s71, %s73
      %p80 = scmp.eq.s32.totalorder %s21, 1
      %p81 = por %p79, %p80
      %p82 = scmp.ne.s32.totalorder %s73, %s74
      %p83 = scmp.eq.s32.totalorder %s21, 0
      %p84 = por %p82, %p83
      %p85 = scmp.ne.s32.totalorder %s73, %s74
      %p86 = scmp.eq.s32.totalorder %s22, 1
      %p87 = por %p85, %p86
      %p89 = scmp.ne.s32.totalorder %s74, %s88
      %p90 = scmp.eq.s32.totalorder %s22, 0
      %p91 = por %p89, %p90
      %s92 = ssub.s32 %s16, %s23
      %p93 = scmp.eq.s32.totalorder %s92, 0
      %s95 = sadd.s32 %s94, 1
      %s96 = scalar_select %p93, %s94, %s95
      %p99 = pneg %p93
      %p100 = scmp.eq.s32.totalorder %s16, 1
      %p101 = por %p99, %p100
      %p102 = scmp.ne.s32.totalorder %s94, %s97
      %p103 = scmp.eq.s32.totalorder %s16, 0
      %p104 = por %p102, %p103
      %p105 = scmp.ne.s32.totalorder %s94, %s97
      %p106 = scmp.eq.s32.totalorder %s21, 1
      %p107 = por %p105, %p106
      %p108 = scmp.ne.s32.totalorder %s97, %s98
      %p109 = scmp.eq.s32.totalorder %s21, 0
      %p110 = por %p108, %p109
      %p111 = scmp.ne.s32.totalorder %s97, %s98
      %p112 = scmp.eq.s32.totalorder %s22, 1
      %p113 = por %p111, %p112
      %p115 = scmp.ne.s32.totalorder %s98, %s114
      %p116 = scmp.eq.s32.totalorder %s22, 0
      %p117 = por %p115, %p116
      %p118 = scmp.le.s32.totalorder 1, %s16
      %p119 = scmp.lt.s32.totalorder %s16, 3
      %p120 = pnand %p118, %p119
      %p121 = pneg %p120
      // Predicated region
      $region9: #{tpu_custom_call.1} parent=5 // pred_check
        _
      $region10: #{tpu_custom_call.1} parent=5 // pred_check_branch
        %123 = sbr.rel (%p120) target = $region12
      $region11: #{tpu_custom_call.1} parent=5 // pred_region
        %s124 = ssub.s32 %s16, 1
        // Predicated region
        $region13: #{tpu_custom_call.1} parent=11 // pred_check
          %p125 = pneg %p63
        $region14: #{tpu_custom_call.1} parent=11 // pred_check_branch
          %127 = sbr.rel (%p125) target = $region16
        $region15: #{tpu_custom_call.1} parent=11 // pred_region
          %129 = vsyncadd [#allocation6], 0
          %s130 = sshll.u32 %s1, 4
          %s131 = int_to_ptr.hbm [resolvable:$true] %s130
          %s132 = sshll.u32 [#allocation5], 4
          %s133 = int_to_ptr.vmem [resolvable:$true] %s132
          %138 = dma.hbm_to_vmem [thread:$0]  %s131, 3072, %s133, [#allocation6], 64, 64, 4
        $region16: #{tpu_custom_call.1} parent=11 // pred_fallthru
          _
        // Predicated region
        $region17: #{tpu_custom_call.1} parent=11 // pred_check
          %p139 = pneg %p84
        $region18: #{tpu_custom_call.1} parent=11 // pred_check_branch
          %141 = sbr.rel (%p139) target = $region20
        $region19: #{tpu_custom_call.1} parent=11 // pred_region
          %143 = vsyncadd [#allocation6], 0
          %s144 = sshll.u32 %s2, 4
          %s145 = int_to_ptr.hbm [resolvable:$true] %s144
          %s146 = sshll.u32 [#allocation7], 4
          %s147 = int_to_ptr.vmem [resolvable:$true] %s146
          %152 = dma.hbm_to_vmem [thread:$0]  %s145, 48, %s147, [#allocation6], 16, 16, 1
        $region20: #{tpu_custom_call.1} parent=11 // pred_fallthru
          _
      $region12: #{tpu_custom_call.1} parent=5 // pred_fallthru
        _
      %p153 = scmp.lt.s32.totalorder %s16, 2
      // Predicated region
      $region21: #{tpu_custom_call.1} parent=5 // pred_check
        %p154 = pneg %p153
      $region22: #{tpu_custom_call.1} parent=5 // pred_check_branch
        %156 = sbr.rel (%p154) target = $region24
      $region23: #{tpu_custom_call.1} parent=5 // pred_region
        // Predicated region
        $region25: #{tpu_custom_call.1} parent=23 // pred_check
          %p157 = pneg %p36
        $region26: #{tpu_custom_call.1} parent=23 // pred_check_branch
          %159 = sbr.rel (%p157) target = $region28
        $region27: #{tpu_custom_call.1} parent=23 // pred_region
          %s160 = sand.u32 %s26, 1
          %s161 = scalar_lea.sflag [#allocation3], %s160
          %s162 = sand.u32 %s26, 1
          %s163 = smul.addr %s162, 56
          %s164 = scalar_lea.vmem [#allocation2], %s163
          %s165 = smul.u32 7, %s16
          %167 = vsyncadd %s161, 0
          %s168 = smul.addr %s165, 8
          %s169 = scalar_lea.hbm %s0, %s168
          %s170 = sshll.u32 %s169, 4
          %s171 = int_to_ptr.hbm [resolvable:$true] %s170
          %s172 = sshll.u32 %s164, 4
          %s173 = int_to_ptr.vmem [resolvable:$true] %s172
          %178 = dma.hbm_to_vmem [thread:$0]  %s171, 896, %s173, %s161, 128, 128, 8
        $region28: #{tpu_custom_call.1} parent=23 // pred_fallthru
          _
      $region24: #{tpu_custom_call.1} parent=5 // pred_fallthru
        _
      %p179 = scmp.le.s32.totalorder 1, %s16
      %p180 = scmp.lt.s32.totalorder %s16, 3
      %p181 = pnand %p179, %p180
      %p182 = pneg %p181
      // Predicated region
      $region29: #{tpu_custom_call.1} parent=5 // pred_check
        _
      $region30: #{tpu_custom_call.1} parent=5 // pred_check_branch
        %184 = sbr.rel (%p181) target = $region32
      $region31: #{tpu_custom_call.1} parent=5 // pred_region
        %s185 = ssub.s32 %s16, 1
        %s186 = sand.u32 %s29, 1
        %s187 = scalar_lea.sflag [#allocation3], %s186
        %s188 = sand.u32 %s29, 1
        %s189 = smul.addr %s188, 56
        %s190 = scalar_lea.vmem [#allocation2], %s189
        // Predicated region
        $region33: #{tpu_custom_call.1} parent=31 // pred_check
          %p191 = pneg %p42
        $region34: #{tpu_custom_call.1} parent=31 // pred_check_branch
          %193 = sbr.rel (%p191) target = $region36
        $region35: #{tpu_custom_call.1} parent=31 // pred_region
          %195 = dma.done %s187, 896
        $region36: #{tpu_custom_call.1} parent=31 // pred_fallthru
          _
        // Predicated region
        $region37: #{tpu_custom_call.1} parent=31 // pred_check
          %p196 = pneg %p63
        $region38: #{tpu_custom_call.1} parent=31 // pred_check_branch
          %198 = sbr.rel (%p196) target = $region40
        $region39: #{tpu_custom_call.1} parent=31 // pred_region
          %200 = dma.done [#allocation6], 3072
        $region40: #{tpu_custom_call.1} parent=31 // pred_fallthru
          _
        // Predicated region
        $region41: #{tpu_custom_call.1} parent=31 // pred_check
          %p201 = pneg %p84
        $region42: #{tpu_custom_call.1} parent=31 // pred_check_branch
          %203 = sbr.rel (%p201) target = $region44
        $region43: #{tpu_custom_call.1} parent=31 // pred_region
          %205 = dma.done [#allocation6], 48
        $region44: #{tpu_custom_call.1} parent=31 // pred_fallthru
          _
        %s206 = sand.u32 %s29, 1
        %s207 = scalar_lea.sflag [#allocation3], %s206
        %s208 = sand.u32 %s29, 1
        %s209 = smul.addr %s208, 56
        %s210 = scalar_lea.vmem [#allocation2], %s209
        %p211 = pneg %p42
        %p212 = pneg %p39
        %p213 = pneg %p63
        %p214 = pneg %p60
        %p215 = pneg %p84
        %p216 = pneg %p81
        %p217 = pneg %p110
        %p218 = pneg %p107
        %s219 = sand.u32 %s97, 1
        %s220 = scalar_lea.sflag [#allocation4], %s219
        %s221 = sand.u32 %s97, 1
        %s222 = smul.addr %s221, 56
        %s223 = scalar_lea.vmem [#allocation8], %s222
        %s224 = smul.u32 7, %s21
        %s225 = smul.u32 7, %s21
        %v226 = vld [vmem:[%s190] sm:$0xff]
        %v227 = vld [vmem:[%s190 + $0x8] sm:$0xff]
        %v228 = vld [vmem:[%s190 + $0x10] sm:$0xff]
        %v229 = vld [vmem:[%s190 + $0x18] sm:$0xff]
        %v230 = vld [vmem:[%s190 + $0x20] sm:$0xff]
        %v231 = vld [vmem:[%s190 + $0x28] sm:$0xff]
        %v232 = vld [vmem:[%s190 + $0x30] sm:$0xff]
        %v233 = vld [vmem:[#allocation5] sm:$0xf]
        %v234 = vld [vmem:[#allocation5 + $0x4] sm:$0xf]
        %v235 = vld [vmem:[#allocation5 + $0x8] sm:$0xf]
        %v236 = vld [vmem:[#allocation5 + $0xc] sm:$0xf]
        %v237 = vld [vmem:[#allocation5 + $0x10] sm:$0xf]
        %v238 = vld [vmem:[#allocation5 + $0x14] sm:$0xf]
        %v239 = vld [vmem:[#allocation5 + $0x18] sm:$0xf]
        %v240 = vld [vmem:[#allocation5 + $0x1c] sm:$0xf]
        %v241 = vld [vmem:[#allocation5 + $0x20] sm:$0xf]
        %v242 = vld [vmem:[#allocation5 + $0x24] sm:$0xf]
        %v243 = vld [vmem:[#allocation5 + $0x28] sm:$0xf]
        %v244 = vld [vmem:[#allocation5 + $0x2c] sm:$0xf]
        %v245 = vld [vmem:[#allocation5 + $0x30] sm:$0xf]
        %v246 = vld [vmem:[#allocation5 + $0x34] sm:$0xf]
        %v247 = vld [vmem:[#allocation5 + $0x38] sm:$0xf]
        %v248 = vld [vmem:[#allocation5 + $0x3c] sm:$0xf]
        %v249 = vld [vmem:[#allocation7] sm:$0x1]
        %v250 = vpack.c.bf16 %v227, %v226
        %v251 = vpack.c.bf16 %v229, %v228
        %v252 = vpack.c.bf16 %v231, %v230
        %v253 = vpack.c.bf16 %v232, %v232
        %v255 = vperm.slane %v249, 0
        %v273 = vunpack.c.l.b16 %v233
        %v274 = vunpack.c.l.b16 %v234
        %v275 = vunpack.c.l.b16 %v235
        %v276 = vunpack.c.l.b16 %v236
        %v277 = vunpack.c.l.b16 %v237
        %v278 = vunpack.c.l.b16 %v238
        %v279 = vunpack.c.l.b16 %v239
        %v280 = vunpack.c.l.b16 %v240
        %v281 = vunpack.c.l.b16 %v241
        %v282 = vunpack.c.l.b16 %v242
        %v283 = vunpack.c.l.b16 %v243
        %v284 = vunpack.c.l.b16 %v244
        %v285 = vunpack.c.l.b16 %v245
        %v286 = vunpack.c.l.b16 %v246
        %v287 = vunpack.c.l.b16 %v247
        %v288 = vunpack.c.l.b16 %v248
        %v289 = vpack.c.b16 %v274, %v273
        %v290 = vpack.c.b16 %v276, %v275
        %v291 = vpack.c.b16 %v278, %v277
        %v292 = vpack.c.b16 %v280, %v279
        %v293 = vpack.c.b16 %v282, %v281
        %v294 = vpack.c.b16 %v284, %v283
        %v295 = vpack.c.b16 %v286, %v285
        %v296 = vpack.c.b16 %v288, %v287
        %305 = vmatpush.bf16.msra.mxu0 %v296
        %306 = vmatpush.bf16.msra.mxu0 %v295
        %307 = vmatpush.bf16.msra.mxu0 %v294
        %308 = vmatpush.bf16.msra.mxu0 %v293
        %309 = vmatpush.bf16.msra.mxu0 %v292
        %310 = vmatpush.bf16.msra.mxu0 %v291
        %311 = vmatpush.bf16.msra.mxu0 %v290
        %312 = vmatpush.bf16.msra.mxu0 %v289
        %313 = vmatmul.bf16.gmra.mxu0 %v250
        %v314 = vpop.f32.mrf.mxu0
        %v315 = vadd.f32 %v255, %v314
        %v316 = vpop.f32.mrf.mxu0
        %v317 = vadd.f32 %v255, %v316
        %318 = vmatmul.bf16.gmra.mxu0 %v251
        %v319 = vpop.f32.mrf.mxu0
        %v320 = vadd.f32 %v255, %v319
        %v321 = vpop.f32.mrf.mxu0
        %v322 = vadd.f32 %v255, %v321
        %323 = vmatmul.bf16.gmra.mxu0 %v252
        %v324 = vpop.f32.mrf.mxu0
        %v325 = vadd.f32 %v255, %v324
        %v326 = vpop.f32.mrf.mxu0
        %v327 = vadd.f32 %v255, %v326
        %328 = vmatmul.bf16.gmra.mxu0 %v253
        %v329 = vpop.f32.mrf.mxu0
        %v330 = vadd.f32 %v255, %v329
        %v331 = vpop.f32.mrf.mxu0
        %332 = vdwg.mxu0
        %v333 = vmax.f32 %v315, 0.0
        %v334 = vmax.f32 %v317, 0.0
        %v335 = vmax.f32 %v320, 0.0
        %v336 = vmax.f32 %v322, 0.0
        %v337 = vmax.f32 %v325, 0.0
        %v338 = vmax.f32 %v327, 0.0
        %v339 = vmax.f32 %v330, 0.0
        %s340 = scalar_lea.vmem [#allocation5], 64
        %v341 = vld [vmem:[%s340] sm:$0xf]
        %v342 = vld [vmem:[%s340 + $0x4] sm:$0xf]
        %v343 = vld [vmem:[%s340 + $0x8] sm:$0xf]
        %v344 = vld [vmem:[%s340 + $0xc] sm:$0xf]
        %v345 = vld [vmem:[%s340 + $0x10] sm:$0xf]
        %v346 = vld [vmem:[%s340 + $0x14] sm:$0xf]
        %v347 = vld [vmem:[%s340 + $0x18] sm:$0xf]
        %v348 = vld [vmem:[%s340 + $0x1c] sm:$0xf]
        %v349 = vld [vmem:[%s340 + $0x20] sm:$0xf]
        %v350 = vld [vmem:[%s340 + $0x24] sm:$0xf]
        %v351 = vld [vmem:[%s340 + $0x28] sm:$0xf]
        %v352 = vld [vmem:[%s340 + $0x2c] sm:$0xf]
        %v353 = vld [vmem:[%s340 + $0x30] sm:$0xf]
        %v354 = vld [vmem:[%s340 + $0x34] sm:$0xf]
        %v355 = vld [vmem:[%s340 + $0x38] sm:$0xf]
        %v356 = vld [vmem:[%s340 + $0x3c] sm:$0xf]
        %s357 = scalar_lea.vmem [#allocation7], 1
        %v358 = vld [vmem:[%s357] sm:$0x1]
        %v359 = vpack.c.bf16 %v334, %v333
        %v360 = vpack.c.bf16 %v336, %v335
        %v361 = vpack.c.bf16 %v338, %v337
        %v362 = vpack.c.bf16 %v339, %v339
        %v364 = vperm.slane %v358, 0
        %v382 = vunpack.c.l.b16 %v341
        %v383 = vunpack.c.l.b16 %v342
        %v384 = vunpack.c.l.b16 %v343
        %v385 = vunpack.c.l.b16 %v344
        %v386 = vunpack.c.l.b16 %v345
        %v387 = vunpack.c.l.b16 %v346
        %v388 = vunpack.c.l.b16 %v347
        %v389 = vunpack.c.l.b16 %v348
        %v390 = vunpack.c.l.b16 %v349
        %v391 = vunpack.c.l.b16 %v350
        %v392 = vunpack.c.l.b16 %v351
        %v393 = vunpack.c.l.b16 %v352
        %v394 = vunpack.c.l.b16 %v353
        %v395 = vunpack.c.l.b16 %v354
        %v396 = vunpack.c.l.b16 %v355
        %v397 = vunpack.c.l.b16 %v356
        %v398 = vpack.c.b16 %v383, %v382
        %v399 = vpack.c.b16 %v385, %v384
        %v400 = vpack.c.b16 %v387, %v386
        %v401 = vpack.c.b16 %v389, %v388
        %v402 = vpack.c.b16 %v391, %v390
        %v403 = vpack.c.b16 %v393, %v392
        %v404 = vpack.c.b16 %v395, %v394
        %v405 = vpack.c.b16 %v397, %v396
        %414 = vmatpush.bf16.msra.mxu0 %v405
        %415 = vmatpush.bf16.msra.mxu0 %v404
        %416 = vmatpush.bf16.msra.mxu0 %v403
        %417 = vmatpush.bf16.msra.mxu0 %v402
        %418 = vmatpush.bf16.msra.mxu0 %v401
        %419 = vmatpush.bf16.msra.mxu0 %v400
        %420 = vmatpush.bf16.msra.mxu0 %v399
        %421 = vmatpush.bf16.msra.mxu0 %v398
        %422 = vmatmul.bf16.gmra.mxu0 %v359
        %v423 = vpop.f32.mrf.mxu0
        %v424 = vadd.f32 %v364, %v423
        %v425 = vpop.f32.mrf.mxu0
        %v426 = vadd.f32 %v364, %v425
        %427 = vmatmul.bf16.gmra.mxu0 %v360
        %v428 = vpop.f32.mrf.mxu0
        %v429 = vadd.f32 %v364, %v428
        %v430 = vpop.f32.mrf.mxu0
        %v431 = vadd.f32 %v364, %v430
        %432 = vmatmul.bf16.gmra.mxu0 %v361
        %v433 = vpop.f32.mrf.mxu0
        %v434 = vadd.f32 %v364, %v433
        %v435 = vpop.f32.mrf.mxu0
        %v436 = vadd.f32 %v364, %v435
        %437 = vmatmul.bf16.gmra.mxu0 %v362
        %v438 = vpop.f32.mrf.mxu0
        %v439 = vadd.f32 %v364, %v438
        %v440 = vpop.f32.mrf.mxu0
        %441 = vdwg.mxu0
        %v442 = vmax.f32 %v424, 0.0
        %v443 = vmax.f32 %v426, 0.0
        %v444 = vmax.f32 %v429, 0.0
        %v445 = vmax.f32 %v431, 0.0
        %v446 = vmax.f32 %v434, 0.0
        %v447 = vmax.f32 %v436, 0.0
        %v448 = vmax.f32 %v439, 0.0
        %s449 = scalar_lea.vmem [#allocation5], 128
        %v450 = vld [vmem:[%s449] sm:$0xf]
        %v451 = vld [vmem:[%s449 + $0x4] sm:$0xf]
        %v452 = vld [vmem:[%s449 + $0x8] sm:$0xf]
        %v453 = vld [vmem:[%s449 + $0xc] sm:$0xf]
        %v454 = vld [vmem:[%s449 + $0x10] sm:$0xf]
        %v455 = vld [vmem:[%s449 + $0x14] sm:$0xf]
        %v456 = vld [vmem:[%s449 + $0x18] sm:$0xf]
        %v457 = vld [vmem:[%s449 + $0x1c] sm:$0xf]
        %v458 = vld [vmem:[%s449 + $0x20] sm:$0xf]
        %v459 = vld [vmem:[%s449 + $0x24] sm:$0xf]
        %v460 = vld [vmem:[%s449 + $0x28] sm:$0xf]
        %v461 = vld [vmem:[%s449 + $0x2c] sm:$0xf]
        %v462 = vld [vmem:[%s449 + $0x30] sm:$0xf]
        %v463 = vld [vmem:[%s449 + $0x34] sm:$0xf]
        %v464 = vld [vmem:[%s449 + $0x38] sm:$0xf]
        %v465 = vld [vmem:[%s449 + $0x3c] sm:$0xf]
        %s466 = scalar_lea.vmem [#allocation7], 2
        %v467 = vld [vmem:[%s466] sm:$0x1]
        %v468 = vpack.c.bf16 %v443, %v442
        %v469 = vpack.c.bf16 %v445, %v444
        %v470 = vpack.c.bf16 %v447, %v446
        %v471 = vpack.c.bf16 %v448, %v448
        %v473 = vperm.slane %v467, 0
        %v491 = vunpack.c.l.b16 %v450
        %v492 = vunpack.c.l.b16 %v451
        %v493 = vunpack.c.l.b16 %v452
        %v494 = vunpack.c.l.b16 %v453
        %v495 = vunpack.c.l.b16 %v454
        %v496 = vunpack.c.l.b16 %v455
        %v497 = vunpack.c.l.b16 %v456
        %v498 = vunpack.c.l.b16 %v457
        %v499 = vunpack.c.l.b16 %v458
        %v500 = vunpack.c.l.b16 %v459
        %v501 = vunpack.c.l.b16 %v460
        %v502 = vunpack.c.l.b16 %v461
        %v503 = vunpack.c.l.b16 %v462
        %v504 = vunpack.c.l.b16 %v463
        %v505 = vunpack.c.l.b16 %v464
        %v506 = vunpack.c.l.b16 %v465
        %v507 = vpack.c.b16 %v492, %v491
        %v508 = vpack.c.b16 %v494, %v493
        %v509 = vpack.c.b16 %v496, %v495
        %v510 = vpack.c.b16 %v498, %v497
        %v511 = vpack.c.b16 %v500, %v499
        %v512 = vpack.c.b16 %v502, %v501
        %v513 = vpack.c.b16 %v504, %v503
        %v514 = vpack.c.b16 %v506, %v505
        %523 = vmatpush.bf16.msra.mxu0 %v514
        %524 = vmatpush.bf16.msra.mxu0 %v513
        %525 = vmatpush.bf16.msra.mxu0 %v512
        %526 = vmatpush.bf16.msra.mxu0 %v511
        %527 = vmatpush.bf16.msra.mxu0 %v510
        %528 = vmatpush.bf16.msra.mxu0 %v509
        %529 = vmatpush.bf16.msra.mxu0 %v508
        %530 = vmatpush.bf16.msra.mxu0 %v507
        %531 = vmatmul.bf16.gmra.mxu0 %v468
        %v532 = vpop.f32.mrf.mxu0
        %v533 = vadd.f32 %v473, %v532
        %v534 = vpop.f32.mrf.mxu0
        %v535 = vadd.f32 %v473, %v534
        %536 = vmatmul.bf16.gmra.mxu0 %v469
        %v537 = vpop.f32.mrf.mxu0
        %v538 = vadd.f32 %v473, %v537
        %v539 = vpop.f32.mrf.mxu0
        %v540 = vadd.f32 %v473, %v539
        %541 = vmatmul.bf16.gmra.mxu0 %v470
        %v542 = vpop.f32.mrf.mxu0
        %v543 = vadd.f32 %v473, %v542
        %v544 = vpop.f32.mrf.mxu0
        %v545 = vadd.f32 %v473, %v544
        %546 = vmatmul.bf16.gmra.mxu0 %v471
        %v547 = vpop.f32.mrf.mxu0
        %v548 = vadd.f32 %v473, %v547
        %v549 = vpop.f32.mrf.mxu0
        %550 = vdwg.mxu0
        %551 = vst [vmem:[%s223] sm:$0xff] %v533
        %552 = vst [vmem:[%s223 + $0x8] sm:$0xff] %v535
        %553 = vst [vmem:[%s223 + $0x10] sm:$0xff] %v538
        %554 = vst [vmem:[%s223 + $0x18] sm:$0xff] %v540
        %555 = vst [vmem:[%s223 + $0x20] sm:$0xff] %v543
        %556 = vst [vmem:[%s223 + $0x28] sm:$0xff] %v545
        %557 = vst [vmem:[%s223 + $0x30] sm:$0xff] %v548
        %s558 = sand.u32 %s97, 1
        %s559 = scalar_lea.sflag [#allocation4], %s558
        %s560 = sand.u32 %s97, 1
        %s561 = smul.addr %s560, 56
        %s562 = scalar_lea.vmem [#allocation8], %s561
        // Predicated region
        $region45: #{tpu_custom_call.1} parent=31 // pred_check
          %p563 = pneg %p107
        $region46: #{tpu_custom_call.1} parent=31 // pred_check_branch
          %565 = sbr.rel (%p563) target = $region48
        $region47: #{tpu_custom_call.1} parent=31 // pred_region
          %s566 = smul.u32 7, %s21
          %568 = vsyncadd %s559, 0
          %s569 = smul.addr %s566, 8
          %s570 = scalar_lea.hbm %s3, %s569
          %s571 = sshll.u32 %s562, 4
          %s572 = int_to_ptr.vmem [resolvable:$true] %s571
          %s573 = sshll.u32 %s570, 4
          %s574 = int_to_ptr.hbm [resolvable:$true] %s573
          %579 = dma.vmem_to_hbm [thread:$0]  %s572, 896, %s574, %s559, 128, 128, 8
        $region48: #{tpu_custom_call.1} parent=31 // pred_fallthru
          _
      $region32: #{tpu_custom_call.1} parent=5 // pred_fallthru
        _
      %p580 = scmp.le.s32.totalorder 2, %s16
      // Predicated region
      $region49: #{tpu_custom_call.1} parent=5 // pred_check
        %p581 = pneg %p580
      $region50: #{tpu_custom_call.1} parent=5 // pred_check_branch
        %583 = sbr.rel (%p581) target = $region52
      $region51: #{tpu_custom_call.1} parent=5 // pred_region
        %s584 = ssub.s32 %s16, 2
        // Predicated region
        $region53: #{tpu_custom_call.1} parent=51 // pred_check
          %p585 = pneg %p113
        $region54: #{tpu_custom_call.1} parent=51 // pred_check_branch
          %587 = sbr.rel (%p585) target = $region56
        $region55: #{tpu_custom_call.1} parent=51 // pred_region
          %s588 = sand.u32 %s98, 1
          %s589 = scalar_lea.sflag [#allocation4], %s588
          %s590 = sand.u32 %s98, 1
          %s591 = smul.addr %s590, 56
          %s592 = scalar_lea.vmem [#allocation8], %s591
          %594 = dma.done %s589, 896
        $region56: #{tpu_custom_call.1} parent=51 // pred_fallthru
          _
      $region52: #{tpu_custom_call.1} parent=5 // pred_fallthru
        _
    $region6: #{tpu_custom_call.1} parent=1 // loop_footer
      %s20 = sadd.s32 1, %s16
    $region7: #{tpu_custom_call.1} parent=1 // loop_footer_branch
      %15 = sbr.rel target = $region3
    $region8: #{tpu_custom_call.1} parent=1 // loop_exit
      _
    %595 = vsyncpa [#allocation3], 1
    %s596 = scalar_lea.sflag [#allocation3], 1
    %597 = vsyncpa %s596, 1
    %598 = vsyncpa [#allocation6], 1
    %599 = vsyncpa [#allocation4], 1
    %s600 = scalar_lea.sflag [#allocation4], 1
    %601 = vsyncpa %s600, 1

</llo_original>
